<compile_context>
chip_gen: v7x
topology: tpu7x:2x2x1
jax: 0.10.0
libtpu: 0.0.40
codegen_flags: <defaults>
</compile_context>

<pallas_src>
import math

import jax
import jax.numpy as jnp
from jax.experimental import pallas as pl
from jax.experimental.pallas import tpu as pltpu

LANE = 128


# ----------------------------------------------------------------------------
# Pallas kernel: fused 3-layer MLP
# ----------------------------------------------------------------------------
def _mlp_kernel(x_ref, w1_ref, b1_ref, w2_ref, b2_ref, w3_ref, b3_ref, o_ref):
    # x: (T, 1) f32; w1/b1: (1, H) f32; w2: (H, H) bf16; w3: (H, C) bf16.
    x = x_ref[...]

    # Layer 1: K=1 contraction -> broadcast multiply on the VPU (frees MXU).
    h1 = jnp.maximum(x * w1_ref[...] + b1_ref[...], 0.0)            # (T, H) f32

    # Layer 2: bf16 MXU operands, f32 accumulate, f32 elementwise.
    h2 = jnp.dot(h1.astype(jnp.bfloat16), w2_ref[...],
                 preferred_element_type=jnp.float32)
    h2 = jnp.maximum(h2 + b2_ref[...], 0.0)

    # Layer 3: bf16 MXU operands, f32 accumulate; lane-dense 128-wide store.
    out = jnp.dot(h2.astype(jnp.bfloat16), w3_ref[...],
                  preferred_element_type=jnp.float32)
    o_ref[...] = (out + b3_ref[...]).astype(o_ref.dtype)


# ----------------------------------------------------------------------------
# Wrapper
# ----------------------------------------------------------------------------
def predictor_from_loc_scale(loc_scale, params, *, row_tile=1024):
    """Applies the PredictorFromLocScale MLP.

    Args:
      loc_scale: [batch_size, 3 * num_patches] float array.
      params: dict with w1[1,H], b1[1,H], w2[H,H], b2[1,H], w3[H,C], b3[1,C].
    Returns:
      [batch_size, 3 * num_patches, num_classes] per-scalar class logits.
    """
    b, p3 = loc_scale.shape
    w1 = params["w1"].astype(jnp.float32)
    b1 = params["b1"].astype(jnp.float32)
    w2 = params["w2"].astype(jnp.float32)
    b2 = params["b2"].astype(jnp.float32)
    w3 = params["w3"].astype(jnp.float32)
    b3 = params["b3"].astype(jnp.float32)
    hidden = w1.shape[1]
    num_classes = w3.shape[1]

    # Pad hidden / class dims to full 128-lane width (zero padding: padded
    # hidden units stay exactly 0 through ReLU, padded logits are sliced off).
    hp = pl.cdiv(hidden, LANE) * LANE
    cp = pl.cdiv(num_classes, LANE) * LANE
    w1p = jnp.pad(w1, ((0, 0), (0, hp - hidden)))
    b1p = jnp.pad(b1, ((0, 0), (0, hp - hidden)))
    w2p = jnp.pad(w2, ((0, hp - hidden), (0, hp - hidden))).astype(jnp.bfloat16)
    b2p = jnp.pad(b2, ((0, 0), (0, hp - hidden)))
    w3p = jnp.pad(w3, ((0, hp - hidden), (0, cp - num_classes))).astype(jnp.bfloat16)
    b3p = jnp.pad(b3, ((0, 0), (0, cp - num_classes)))

    # Flatten each loc/scale scalar to a row of a single feature; rows are the
    # M dimension of the matmuls.
    n = b * p3
    tile = row_tile if n >= row_tile else pl.cdiv(n, 8) * 8
    n_pad = pl.cdiv(n, tile) * tile
    x = loc_scale.reshape(n, 1).astype(jnp.float32)
    if n_pad != n:
        x = jnp.pad(x, ((0, n_pad - n), (0, 0)))

    grid = (n_pad // tile,)

    out = pl.pallas_call(
        _mlp_kernel,
        out_shape=jax.ShapeDtypeStruct((n_pad, cp), jnp.float32),
        grid_spec=pltpu.PrefetchScalarGridSpec(
            num_scalar_prefetch=0,
            grid=grid,
            in_specs=[
                pl.BlockSpec((tile, 1), lambda i: (i, 0)),     # x rows (M dim)
                pl.BlockSpec((1, hp), lambda i: (0, 0)),       # w1 (resident)
                pl.BlockSpec((1, hp), lambda i: (0, 0)),       # b1
                pl.BlockSpec((hp, hp), lambda i: (0, 0)),      # w2 (bf16, resident)
                pl.BlockSpec((1, hp), lambda i: (0, 0)),       # b2
                pl.BlockSpec((hp, cp), lambda i: (0, 0)),      # w3 (bf16, resident)
                pl.BlockSpec((1, cp), lambda i: (0, 0)),       # b3
            ],
            out_specs=pl.BlockSpec((tile, cp), lambda i: (i, 0)),
        ),
        compiler_params=pltpu.CompilerParams(
            # Row axis is embarrassingly parallel -> shards across TCs on v7x.
            dimension_semantics=("parallel",),
        ),
    )(x, w1p, b1p, w2p, b2p, w3p, b3p)

    out = out[:n, :num_classes]          # strip row + lane padding
    return out.reshape(b, p3, num_classes)


# ----------------------------------------------------------------------------
# Deterministic parameter init (xavier_uniform weights, zero biases)
# ----------------------------------------------------------------------------
def _xavier_uniform(key, fan_in, fan_out):
    bound = math.sqrt(6.0 / (fan_in + fan_out))
    # Stored as [in, out] so the kernel computes x @ W.
    return jax.random.uniform(key, (fan_in, fan_out), jnp.float32, -bound, bound)


def init_params(key, num_classes, hidden_size=96):
    k1, k2, k3 = jax.random.split(key, 3)
    return {
        "w1": _xavier_uniform(k1, 1, hidden_size),
        "b1": jnp.zeros((1, hidden_size), jnp.float32),
        "w2": _xavier_uniform(k2, hidden_size, hidden_size),
        "b2": jnp.zeros((1, hidden_size), jnp.float32),
        "w3": _xavier_uniform(k3, hidden_size, num_classes),
        "b3": jnp.zeros((1, num_classes), jnp.float32),
    }


def _reference(loc_scale, params):
    """Pure-JAX reference mirroring the kernel's precision (bf16 MXU ops)."""
    x = loc_scale.reshape(-1, 1).astype(jnp.float32)
    w2 = params["w2"].astype(jnp.bfloat16)
    w3 = params["w3"].astype(jnp.bfloat16)
    h = jnp.maximum(x * params["w1"] + params["b1"], 0.0)
    h = jnp.dot(h.astype(jnp.bfloat16), w2, preferred_element_type=jnp.float32)
    h = jnp.maximum(h + params["b2"], 0.0)
    o = jnp.dot(h.astype(jnp.bfloat16), w3, preferred_element_type=jnp.float32)
    o = o + params["b3"]
    b, p3 = loc_scale.shape
    return o.reshape(b, p3, -1)


if __name__ == "__main__":
    key = jax.random.PRNGKey(0)
    k_param, k_in = jax.random.split(key)

    batch_size = 2
    num_patches = 8          # loc_scale last dim = 3 * num_patches = 24
    num_classes = 10
    hidden_size = 96

    params = init_params(k_param, num_classes, hidden_size)
    loc_scale = jax.random.normal(k_in, (batch_size, 3 * num_patches), jnp.float32)

    out = predictor_from_loc_scale(loc_scale, params)
    out = jax.block_until_ready(out)

    ref = _reference(loc_scale, params)
    assert out.shape == (batch_size, 3 * num_patches, num_classes), out.shape
    assert jnp.allclose(out, ref, atol=1e-3, rtol=1e-3), "mismatch vs reference"

    print("KERNEL_OK")
</pallas_src>

<mosaic_0001>
module attributes {stable_mosaic.version = 11 : i64} {
  func.func @_mlp_kernel(%arg0: i32, %arg1: memref<48x1xf32, #tpu.memory_space<vmem>>, %arg2: memref<1x128xf32, #tpu.memory_space<vmem>>, %arg3: memref<1x128xf32, #tpu.memory_space<vmem>>, %arg4: memref<128x128xbf16, #tpu.memory_space<vmem>>, %arg5: memref<1x128xf32, #tpu.memory_space<vmem>>, %arg6: memref<128x128xbf16, #tpu.memory_space<vmem>>, %arg7: memref<1x128xf32, #tpu.memory_space<vmem>>, %arg8: memref<48x128xf32, #tpu.memory_space<vmem>>) attributes {dimension_semantics = [#tpu.dimension_semantics<parallel>], iteration_bounds = array<i64: 1>, scalar_prefetch = 0 : i64, scratch_operands = 0 : i64, tpu.core_type = #tpu.core_type<tc>, window_params = [{transform_indices = @transform_0, window_bounds = array<i64: 48, 1>}, {pipeline_mode = #tpu.pipeline_mode<synchronous>, transform_indices = @transform_1, window_bounds = array<i64: 1, 128>}, {pipeline_mode = #tpu.pipeline_mode<synchronous>, transform_indices = @transform_2, window_bounds = array<i64: 1, 128>}, {pipeline_mode = #tpu.pipeline_mode<synchronous>, transform_indices = @transform_3, window_bounds = array<i64: 128, 128>}, {pipeline_mode = #tpu.pipeline_mode<synchronous>, transform_indices = @transform_4, window_bounds = array<i64: 1, 128>}, {pipeline_mode = #tpu.pipeline_mode<synchronous>, transform_indices = @transform_5, window_bounds = array<i64: 128, 128>}, {pipeline_mode = #tpu.pipeline_mode<synchronous>, transform_indices = @transform_6, window_bounds = array<i64: 1, 128>}, {transform_indices = @transform_7, window_bounds = array<i64: 48, 128>}]} {
    %c0 = arith.constant 0 : index
    %c0_0 = arith.constant 0 : index
    %0 = vector.load %arg1[%c0, %c0_0] : memref<48x1xf32, #tpu.memory_space<vmem>>, vector<48x1xf32>
    %c0_1 = arith.constant 0 : index
    %c0_2 = arith.constant 0 : index
    %1 = vector.load %arg2[%c0_1, %c0_2] : memref<1x128xf32, #tpu.memory_space<vmem>>, vector<1x128xf32>
    %2 = vector.broadcast %0 : vector<48x1xf32> to vector<48x128xf32>
    %3 = vector.broadcast %1 : vector<1x128xf32> to vector<48x128xf32>
    %4 = arith.mulf %2, %3 : vector<48x128xf32>
    %c0_3 = arith.constant 0 : index
    %c0_4 = arith.constant 0 : index
    %5 = vector.load %arg3[%c0_3, %c0_4] : memref<1x128xf32, #tpu.memory_space<vmem>>, vector<1x128xf32>
    %6 = vector.broadcast %5 : vector<1x128xf32> to vector<48x128xf32>
    %7 = arith.addf %4, %6 : vector<48x128xf32>
    %cst = arith.constant 0.000000e+00 : f32
    %8 = vector.broadcast %cst : f32 to vector<48x128xf32>
    %9 = arith.maximumf %7, %8 : vector<48x128xf32>
    %10 = arith.truncf %9 : vector<48x128xf32> to vector<48x128xbf16>
    %c0_5 = arith.constant 0 : index
    %c0_6 = arith.constant 0 : index
    %11 = vector.load %arg4[%c0_5, %c0_6] : memref<128x128xbf16, #tpu.memory_space<vmem>>, vector<128x128xbf16>
    %cst_7 = arith.constant dense<0.000000e+00> : vector<48x128xf32>
    %12 = tpu.matmul %10, %11, %cst_7 {dimension_numbers = #tpu.dot_dimension_numbers<[1], [0], [0], [1], [0, 0, 1, 1], [], []>} : vector<48x128xbf16>, vector<128x128xbf16>, vector<48x128xf32> -> vector<48x128xf32>
    %c0_8 = arith.constant 0 : index
    %c0_9 = arith.constant 0 : index
    %13 = vector.load %arg5[%c0_8, %c0_9] : memref<1x128xf32, #tpu.memory_space<vmem>>, vector<1x128xf32>
    %14 = vector.broadcast %13 : vector<1x128xf32> to vector<48x128xf32>
    %15 = arith.addf %12, %14 : vector<48x128xf32>
    %cst_10 = arith.constant 0.000000e+00 : f32
    %16 = vector.broadcast %cst_10 : f32 to vector<48x128xf32>
    %17 = arith.maximumf %15, %16 : vector<48x128xf32>
    %18 = arith.truncf %17 : vector<48x128xf32> to vector<48x128xbf16>
    %c0_11 = arith.constant 0 : index
    %c0_12 = arith.constant 0 : index
    %19 = vector.load %arg6[%c0_11, %c0_12] : memref<128x128xbf16, #tpu.memory_space<vmem>>, vector<128x128xbf16>
    %cst_13 = arith.constant dense<0.000000e+00> : vector<48x128xf32>
    %20 = tpu.matmul %18, %19, %cst_13 {dimension_numbers = #tpu.dot_dimension_numbers<[1], [0], [0], [1], [0, 0, 1, 1], [], []>} : vector<48x128xbf16>, vector<128x128xbf16>, vector<48x128xf32> -> vector<48x128xf32>
    %c0_14 = arith.constant 0 : index
    %c0_15 = arith.constant 0 : index
    %21 = vector.load %arg7[%c0_14, %c0_15] : memref<1x128xf32, #tpu.memory_space<vmem>>, vector<1x128xf32>
    %22 = vector.broadcast %21 : vector<1x128xf32> to vector<48x128xf32>
    %23 = arith.addf %20, %22 : vector<48x128xf32>
    %c0_16 = arith.constant 0 : index
    %c0_17 = arith.constant 0 : index
    %24 = vector.load %arg8[%c0_16, %c0_17] : memref<48x128xf32, #tpu.memory_space<vmem>>, vector<48x128xf32>
    tpu.vector_store %arg8[%c0_16, %c0_17], %23 {strides = array<i32>} : memref<48x128xf32, #tpu.memory_space<vmem>>, vector<48x128xf32>,
    return
  }
  func.func @transform_0(%arg0: i32) -> (i32, i32) {
    %c0_i32 = arith.constant 0 : i32
    %c0_i32_0 = arith.constant 0 : i32
    return %arg0, %c0_i32 : i32, i32
  }
  func.func @transform_1(%arg0: i32) -> (i32, i32) {
    %c0_i32 = arith.constant 0 : i32
    %c0_i32_0 = arith.constant 0 : i32
    %c0_i32_1 = arith.constant 0 : i32
    return %c0_i32, %c0_i32_0 : i32, i32
  }
  func.func @transform_2(%arg0: i32) -> (i32, i32) {
    %c0_i32 = arith.constant 0 : i32
    %c0_i32_0 = arith.constant 0 : i32
    %c0_i32_1 = arith.constant 0 : i32
    return %c0_i32, %c0_i32_0 : i32, i32
  }
  func.func @transform_3(%arg0: i32) -> (i32, i32) {
    %c0_i32 = arith.constant 0 : i32
    %c0_i32_0 = arith.constant 0 : i32
    %c0_i32_1 = arith.constant 0 : i32
    return %c0_i32, %c0_i32_0 : i32, i32
  }
  func.func @transform_4(%arg0: i32) -> (i32, i32) {
    %c0_i32 = arith.constant 0 : i32
    %c0_i32_0 = arith.constant 0 : i32
    %c0_i32_1 = arith.constant 0 : i32
    return %c0_i32, %c0_i32_0 : i32, i32
  }
  func.func @transform_5(%arg0: i32) -> (i32, i32) {
    %c0_i32 = arith.constant 0 : i32
    %c0_i32_0 = arith.constant 0 : i32
    %c0_i32_1 = arith.constant 0 : i32
    return %c0_i32, %c0_i32_0 : i32, i32
  }
  func.func @transform_6(%arg0: i32) -> (i32, i32) {
    %c0_i32 = arith.constant 0 : i32
    %c0_i32_0 = arith.constant 0 : i32
    %c0_i32_1 = arith.constant 0 : i32
    return %c0_i32, %c0_i32_0 : i32, i32
  }
  func.func @transform_7(%arg0: i32) -> (i32, i32) {
    %c0_i32 = arith.constant 0 : i32
    %c0_i32_0 = arith.constant 0 : i32
    return %arg0, %c0_i32 : i32, i32
  }
}

</mosaic_0001>

<llo_original>
// kernel: tpu_custom_call.1
$region0: #{tpu_custom_call.1}
  #allocation0 [shape = 'u32[]', space=smem, size = 0x4, offset = 0x4, fixed_abs, tag = 'smem constant byte address 0x4 - core index']
  #allocation1 [shape = 'u32[144,128]{1,0:T(1,128)}', space=vmem, size = 0x12000, scoped, tag = 'internal scratch']
  %s0 = inlined_call_operand.vmem [shape: f32[48,1], index: 0, kind: input, shape index: {}]
  %s1 = inlined_call_operand.vmem [shape: f32[1,128], index: 1, kind: input, shape index: {}]
  %s2 = inlined_call_operand.vmem [shape: f32[1,128], index: 2, kind: input, shape index: {}]
  %s3 = inlined_call_operand.hbm [shape: bf16[128,128], index: 3, kind: input, shape index: {}]
  %s4 = inlined_call_operand.vmem [shape: f32[1,128], index: 4, kind: input, shape index: {}]
  %s5 = inlined_call_operand.vmem [shape: bf16[128,128], index: 5, kind: input, shape index: {}]
  %s6 = inlined_call_operand.vmem [shape: f32[1,128], index: 6, kind: input, shape index: {}]
  %s7 = inlined_call_operand.hbm [shape: f32[48,128], index: 7, kind: output, shape index: {}]
  %s8 = sld [smem:[#allocation0]]
  $region42: #{tpu_custom_call.1} parent=0
    _
  %s10 = ssub.s32 1, %s8
  %s11 = scalar_select 0, %s10, %s8
  $region1: #{tpu_custom_call.1} parent=0
    #allocation2 [shape = 'u8[32768]{0}', space=vmem, size = 0x8000, scoped, tag = 'input window, operand 3, single buffered']
    #allocation3 [shape = 's32[1]{0}', space=sflag, size = 0x4, scoped, tag = 'scoped memory for tpu_custom_call.1']
    #allocation4 [shape = 's32[1]{0}', space=sflag, size = 0x4, scoped, tag = 'scoped memory for tpu_custom_call.1']
    #allocation5 [shape = 'u8[24576]{0}', space=vmem, size = 0x6000, scoped, tag = 'output window, operand 0, single buffered']
    %12 = vsyncpa [#allocation3], 0
    %13 = vsyncpa [#allocation4], 0
    // Predicated region
    $region2: #{tpu_custom_call.1} parent=1 // pred_check
      _
    $region3: #{tpu_custom_call.1} parent=1 // pred_check_branch
      %15 = sbr.rel (0) target = $region5
    $region4: #{tpu_custom_call.1} parent=1 // pred_region
      _
    $region5: #{tpu_custom_call.1} parent=1 // pred_fallthru
      _
    // Predicated region
    $region6: #{tpu_custom_call.1} parent=1 // pred_check
      _
    $region7: #{tpu_custom_call.1} parent=1 // pred_check_branch
      %17 = sbr.rel (0) target = $region9
    $region8: #{tpu_custom_call.1} parent=1 // pred_region
      _
    $region9: #{tpu_custom_call.1} parent=1 // pred_fallthru
      _
    // Predicated region
    $region10: #{tpu_custom_call.1} parent=1 // pred_check
      _
    $region11: #{tpu_custom_call.1} parent=1 // pred_check_branch
      %19 = sbr.rel (0) target = $region13
    $region12: #{tpu_custom_call.1} parent=1 // pred_region
      _
    $region13: #{tpu_custom_call.1} parent=1 // pred_fallthru
      _
    // Predicated region
    $region14: #{tpu_custom_call.1} parent=1 // pred_check
      _
    $region15: #{tpu_custom_call.1} parent=1 // pred_check_branch
      %21 = sbr.rel (0) target = $region17
    $region16: #{tpu_custom_call.1} parent=1 // pred_region
      %s23 = ssub.s32 1024, 1024
      %24 = vsyncadd [#allocation3], %s23
      %s25 = sshll.u32 [#allocation2], 4
      %s26 = int_to_ptr.vmem [resolvable:$true] %s25
      %31 = dma.hbm_to_vmem [thread:$0]  %s3, 1024, %s26, [#allocation3], 64, 64, 4
    $region17: #{tpu_custom_call.1} parent=1 // pred_fallthru
      _
    // Predicated region
    $region18: #{tpu_custom_call.1} parent=1 // pred_check
      _
    $region19: #{tpu_custom_call.1} parent=1 // pred_check_branch
      %33 = sbr.rel (0) target = $region21
    $region20: #{tpu_custom_call.1} parent=1 // pred_region
      _
    $region21: #{tpu_custom_call.1} parent=1 // pred_fallthru
      _
    // Predicated region
    $region22: #{tpu_custom_call.1} parent=1 // pred_check
      _
    $region23: #{tpu_custom_call.1} parent=1 // pred_check_branch
      %35 = sbr.rel (0) target = $region25
    $region24: #{tpu_custom_call.1} parent=1 // pred_region
      _
    $region25: #{tpu_custom_call.1} parent=1 // pred_fallthru
      _
    // Predicated region
    $region26: #{tpu_custom_call.1} parent=1 // pred_check
      _
    $region27: #{tpu_custom_call.1} parent=1 // pred_check_branch
      %37 = sbr.rel (0) target = $region29
    $region28: #{tpu_custom_call.1} parent=1 // pred_region
      _
    $region29: #{tpu_custom_call.1} parent=1 // pred_fallthru
      _
    // Predicated region
    $region30: #{tpu_custom_call.1} parent=1 // pred_check
      _
    $region31: #{tpu_custom_call.1} parent=1 // pred_check_branch
      %39 = sbr.rel (0) target = $region33
    $region32: #{tpu_custom_call.1} parent=1 // pred_region
      %40 = dma.done [#allocation3], 1024
    $region33: #{tpu_custom_call.1} parent=1 // pred_fallthru
      _
    %v42 = vld [vmem:[%s0] sm:$0xff]
    %v43 = vld [vmem:[%s0 + $0x8] sm:$0xff]
    %v44 = vld [vmem:[%s0 + $0x10] sm:$0xff]
    %v45 = vld [vmem:[%s0 + $0x18] sm:$0xff]
    %v46 = vld [vmem:[%s0 + $0x20] sm:$0xff]
    %v47 = vld [vmem:[%s0 + $0x28] sm:$0xff]
    %v48 = vld [vmem:[%s1] sm:$0x1]
    %50 = vset.pattern.permute.xlu0 0
    %51 = vperm.xlu0 %50, %v42
    %v52 = vpop.permute.xlu0 %51
    %55 = vset.pattern.permute.xlu0 0
    %56 = vperm.xlu0 %55, %v43
    %v57 = vpop.permute.xlu0 %56
    %60 = vset.pattern.permute.xlu0 0
    %61 = vperm.xlu0 %60, %v44
    %v62 = vpop.permute.xlu0 %61
    %65 = vset.pattern.permute.xlu0 0
    %66 = vperm.xlu0 %65, %v45
    %v67 = vpop.permute.xlu0 %66
    %70 = vset.pattern.permute.xlu0 0
    %71 = vperm.xlu0 %70, %v46
    %v72 = vpop.permute.xlu0 %71
    %75 = vset.pattern.permute.xlu0 0
    %76 = vperm.xlu0 %75, %v47
    %v77 = vpop.permute.xlu0 %76
    %v80 = vlaneseq
    %v81 = vshrl.u32 %v80, 7
    %v82 = vsub.s32 0, %v81
    %v83 = vrot.slane %v48, %v82
    %v85 = vmul.f32 %v52, %v83
    %v86 = vmul.f32 %v57, %v83
    %v87 = vmul.f32 %v62, %v83
    %v88 = vmul.f32 %v67, %v83
    %v89 = vmul.f32 %v72, %v83
    %v90 = vmul.f32 %v77, %v83
    %v91 = vld [vmem:[%s2] sm:$0x1]
    %v93 = vlaneseq
    %v94 = vshrl.u32 %v93, 7
    %v95 = vsub.s32 0, %v94
    %v96 = vrot.slane %v91, %v95
    %v98 = vadd.f32 %v85, %v96
    %v99 = vadd.f32 %v86, %v96
    %v100 = vadd.f32 %v87, %v96
    %v101 = vadd.f32 %v88, %v96
    %v102 = vadd.f32 %v89, %v96
    %v103 = vadd.f32 %v90, %v96
    %v104 = vmax.f32 %v98, 0.0
    %v105 = vmax.f32 %v99, 0.0
    %v106 = vmax.f32 %v100, 0.0
    %v107 = vmax.f32 %v101, 0.0
    %v108 = vmax.f32 %v102, 0.0
    %v109 = vmax.f32 %v103, 0.0
    %v110 = vpack.c.bf16 %v105, %v104
    %v111 = vpack.c.bf16 %v107, %v106
    %v112 = vpack.c.bf16 %v109, %v108
    %v113 = vld [vmem:[#allocation2] sm:$0xf]
    %v114 = vld [vmem:[#allocation2 + $0x4] sm:$0xf]
    %v115 = vld [vmem:[#allocation2 + $0x8] sm:$0xf]
    %v116 = vld [vmem:[#allocation2 + $0xc] sm:$0xf]
    %v117 = vld [vmem:[#allocation2 + $0x10] sm:$0xf]
    %v118 = vld [vmem:[#allocation2 + $0x14] sm:$0xf]
    %v119 = vld [vmem:[#allocation2 + $0x18] sm:$0xf]
    %v120 = vld [vmem:[#allocation2 + $0x1c] sm:$0xf]
    %v121 = vld [vmem:[#allocation2 + $0x20] sm:$0xf]
    %v122 = vld [vmem:[#allocation2 + $0x24] sm:$0xf]
    %v123 = vld [vmem:[#allocation2 + $0x28] sm:$0xf]
    %v124 = vld [vmem:[#allocation2 + $0x2c] sm:$0xf]
    %v125 = vld [vmem:[#allocation2 + $0x30] sm:$0xf]
    %v126 = vld [vmem:[#allocation2 + $0x34] sm:$0xf]
    %v127 = vld [vmem:[#allocation2 + $0x38] sm:$0xf]
    %v128 = vld [vmem:[#allocation2 + $0x3c] sm:$0xf]
    %v129 = vld [vmem:[%s4] sm:$0x1]
    %v131 = vlaneseq
    %v132 = vshrl.u32 %v131, 7
    %v133 = vsub.s32 0, %v132
    %v134 = vrot.slane %v129, %v133
    %v152 = vunpack.c.l.b16 %v113
    %v153 = vunpack.c.l.b16 %v114
    %v154 = vunpack.c.l.b16 %v115
    %v155 = vunpack.c.l.b16 %v116
    %v156 = vunpack.c.l.b16 %v117
    %v157 = vunpack.c.l.b16 %v118
    %v158 = vunpack.c.l.b16 %v119
    %v159 = vunpack.c.l.b16 %v120
    %v160 = vunpack.c.l.b16 %v121
    %v161 = vunpack.c.l.b16 %v122
    %v162 = vunpack.c.l.b16 %v123
    %v163 = vunpack.c.l.b16 %v124
    %v164 = vunpack.c.l.b16 %v125
    %v165 = vunpack.c.l.b16 %v126
    %v166 = vunpack.c.l.b16 %v127
    %v167 = vunpack.c.l.b16 %v128
    %v168 = vpack.c.b16 %v153, %v152
    %v169 = vpack.c.b16 %v155, %v154
    %v170 = vpack.c.b16 %v157, %v156
    %v171 = vpack.c.b16 %v159, %v158
    %v172 = vpack.c.b16 %v161, %v160
    %v173 = vpack.c.b16 %v163, %v162
    %v174 = vpack.c.b16 %v165, %v164
    %v175 = vpack.c.b16 %v167, %v166
    %184 = vmatprep.subr.bf16.mxu0 0
    %185 = vmatpush1.bf16.msra.mxu0 %v168
    %186 = vmatprep.subr.bf16.mxu0 0
    %187 = vmatpush1.bf16.msra.mxu0 %v169
    %188 = vmatprep.subr.bf16.mxu0 0
    %189 = vmatpush1.bf16.msra.mxu0 %v170
    %190 = vmatprep.subr.bf16.mxu0 0
    %191 = vmatpush1.bf16.msra.mxu0 %v171
    %192 = vmatprep.subr.bf16.mxu0 0
    %193 = vmatpush1.bf16.msra.mxu0 %v172
    %194 = vmatprep.subr.bf16.mxu0 0
    %195 = vmatpush1.bf16.msra.mxu0 %v173
    %196 = vmatprep.subr.bf16.mxu0 0
    %197 = vmatpush1.bf16.msra.mxu0 %v174
    %198 = vmatprep.subr.bf16.mxu0 0
    %199 = vmatpush1.bf16.msra.mxu0 %v175
    %200 = vmatprep.subr.bf16.mxu0 0
    %201 = vmatpush1.bf16.msra.mxu0 0
    %202 = vmatprep.subr.bf16.mxu0 0
    %203 = vmatpush1.bf16.msra.mxu0 0
    %204 = vmatprep.subr.bf16.mxu0 0
    %205 = vmatpush1.bf16.msra.mxu0 0
    %206 = vmatprep.subr.bf16.mxu0 0
    %207 = vmatpush1.bf16.msra.mxu0 0
    %208 = vmatprep.subr.bf16.mxu0 0
    %209 = vmatpush1.bf16.msra.mxu0 0
    %210 = vmatprep.subr.bf16.mxu0 0
    %211 = vmatpush1.bf16.msra.mxu0 0
    %212 = vmatprep.subr.bf16.mxu0 0
    %213 = vmatpush1.bf16.msra.mxu0 0
    %214 = vmatprep.subr.bf16.mxu0 0
    %215 = vmatpush1.bf16.msra.mxu0 0
    %216 = vmatprep.mubr.bf16.mxu0 0
    %217 = vmatmul.mubr.bf16.gmra.mrb[0].mxu0 %v110
    %v218 = vpop.f32.mrb[0].mxu0
    %v219 = vadd.f32 %v134, %v218
    %v220 = vpop.f32.mrb[0].mxu0
    %v221 = vpop.f32.mrb[0].mxu0
    %v222 = vadd.f32 %v134, %v221
    %v223 = vpop.f32.mrb[0].mxu0
    %224 = vmatprep.mubr.bf16.mxu0 0
    %225 = vmatmul.mubr.bf16.gmra.mrb[0].mxu0 %v111
    %v226 = vpop.f32.mrb[0].mxu0
    %v227 = vadd.f32 %v134, %v226
    %v228 = vpop.f32.mrb[0].mxu0
    %v229 = vpop.f32.mrb[0].mxu0
    %v230 = vadd.f32 %v134, %v229
    %v231 = vpop.f32.mrb[0].mxu0
    %232 = vmatprep.mubr.bf16.mxu0 0
    %233 = vmatmul.mubr.bf16.gmra.mrb[0].mxu0 %v112
    %v234 = vpop.f32.mrb[0].mxu0
    %v235 = vadd.f32 %v134, %v234
    %v236 = vpop.f32.mrb[0].mxu0
    %v237 = vpop.f32.mrb[0].mxu0
    %v238 = vadd.f32 %v134, %v237
    %v239 = vpop.f32.mrb[0].mxu0
    %240 = vdwg.mxu0
    %v241 = vmax.f32 %v219, 0.0
    %v242 = vmax.f32 %v222, 0.0
    %v243 = vmax.f32 %v227, 0.0
    %v244 = vmax.f32 %v230, 0.0
    %v245 = vmax.f32 %v235, 0.0
    %v246 = vmax.f32 %v238, 0.0
    %v247 = vpack.c.bf16 %v242, %v241
    %v248 = vpack.c.bf16 %v244, %v243
    %v249 = vpack.c.bf16 %v246, %v245
    %v250 = vld [vmem:[%s5] sm:$0xf]
    %v251 = vld [vmem:[%s5 + $0x4] sm:$0xf]
    %v252 = vld [vmem:[%s5 + $0x8] sm:$0xf]
    %v253 = vld [vmem:[%s5 + $0xc] sm:$0xf]
    %v254 = vld [vmem:[%s5 + $0x10] sm:$0xf]
    %v255 = vld [vmem:[%s5 + $0x14] sm:$0xf]
    %v256 = vld [vmem:[%s5 + $0x18] sm:$0xf]
    %v257 = vld [vmem:[%s5 + $0x1c] sm:$0xf]
    %v258 = vld [vmem:[%s5 + $0x20] sm:$0xf]
    %v259 = vld [vmem:[%s5 + $0x24] sm:$0xf]
    %v260 = vld [vmem:[%s5 + $0x28] sm:$0xf]
    %v261 = vld [vmem:[%s5 + $0x2c] sm:$0xf]
    %v262 = vld [vmem:[%s5 + $0x30] sm:$0xf]
    %v263 = vld [vmem:[%s5 + $0x34] sm:$0xf]
    %v264 = vld [vmem:[%s5 + $0x38] sm:$0xf]
    %v265 = vld [vmem:[%s5 + $0x3c] sm:$0xf]
    %v266 = vld [vmem:[%s6] sm:$0x1]
    %v268 = vlaneseq
    %v269 = vshrl.u32 %v268, 7
    %v270 = vsub.s32 0, %v269
    %v271 = vrot.slane %v266, %v270
    %v289 = vunpack.c.l.b16 %v250
    %v290 = vunpack.c.l.b16 %v251
    %v291 = vunpack.c.l.b16 %v252
    %v292 = vunpack.c.l.b16 %v253
    %v293 = vunpack.c.l.b16 %v254
    %v294 = vunpack.c.l.b16 %v255
    %v295 = vunpack.c.l.b16 %v256
    %v296 = vunpack.c.l.b16 %v257
    %v297 = vunpack.c.l.b16 %v258
    %v298 = vunpack.c.l.b16 %v259
    %v299 = vunpack.c.l.b16 %v260
    %v300 = vunpack.c.l.b16 %v261
    %v301 = vunpack.c.l.b16 %v262
    %v302 = vunpack.c.l.b16 %v263
    %v303 = vunpack.c.l.b16 %v264
    %v304 = vunpack.c.l.b16 %v265
    %v305 = vpack.c.b16 %v290, %v289
    %v306 = vpack.c.b16 %v292, %v291
    %v307 = vpack.c.b16 %v294, %v293
    %v308 = vpack.c.b16 %v296, %v295
    %v309 = vpack.c.b16 %v298, %v297
    %v310 = vpack.c.b16 %v300, %v299
    %v311 = vpack.c.b16 %v302, %v301
    %v312 = vpack.c.b16 %v304, %v303
    %321 = vmatprep.subr.bf16.mxu0 0
    %322 = vmatpush1.bf16.msra.mxu0 %v305
    %323 = vmatprep.subr.bf16.mxu0 0
    %324 = vmatpush1.bf16.msra.mxu0 %v306
    %325 = vmatprep.subr.bf16.mxu0 0
    %326 = vmatpush1.bf16.msra.mxu0 %v307
    %327 = vmatprep.subr.bf16.mxu0 0
    %328 = vmatpush1.bf16.msra.mxu0 %v308
    %329 = vmatprep.subr.bf16.mxu0 0
    %330 = vmatpush1.bf16.msra.mxu0 %v309
    %331 = vmatprep.subr.bf16.mxu0 0
    %332 = vmatpush1.bf16.msra.mxu0 %v310
    %333 = vmatprep.subr.bf16.mxu0 0
    %334 = vmatpush1.bf16.msra.mxu0 %v311
    %335 = vmatprep.subr.bf16.mxu0 0
    %336 = vmatpush1.bf16.msra.mxu0 %v312
    %337 = vmatprep.subr.bf16.mxu0 0
    %338 = vmatpush1.bf16.msra.mxu0 0
    %339 = vmatprep.subr.bf16.mxu0 0
    %340 = vmatpush1.bf16.msra.mxu0 0
    %341 = vmatprep.subr.bf16.mxu0 0
    %342 = vmatpush1.bf16.msra.mxu0 0
    %343 = vmatprep.subr.bf16.mxu0 0
    %344 = vmatpush1.bf16.msra.mxu0 0
    %345 = vmatprep.subr.bf16.mxu0 0
    %346 = vmatpush1.bf16.msra.mxu0 0
    %347 = vmatprep.subr.bf16.mxu0 0
    %348 = vmatpush1.bf16.msra.mxu0 0
    %349 = vmatprep.subr.bf16.mxu0 0
    %350 = vmatpush1.bf16.msra.mxu0 0
    %351 = vmatprep.subr.bf16.mxu0 0
    %352 = vmatpush1.bf16.msra.mxu0 0
    %353 = vmatprep.mubr.bf16.mxu0 0
    %354 = vmatmul.mubr.bf16.gmra.mrb[0].mxu0 %v247
    %v355 = vpop.f32.mrb[0].mxu0
    %v356 = vadd.f32 %v271, %v355
    %v357 = vpop.f32.mrb[0].mxu0
    %v358 = vpop.f32.mrb[0].mxu0
    %v359 = vadd.f32 %v271, %v358
    %v360 = vpop.f32.mrb[0].mxu0
    %361 = vmatprep.mubr.bf16.mxu0 0
    %362 = vmatmul.mubr.bf16.gmra.mrb[0].mxu0 %v248
    %v363 = vpop.f32.mrb[0].mxu0
    %v364 = vadd.f32 %v271, %v363
    %v365 = vpop.f32.mrb[0].mxu0
    %v366 = vpop.f32.mrb[0].mxu0
    %v367 = vadd.f32 %v271, %v366
    %v368 = vpop.f32.mrb[0].mxu0
    %369 = vmatprep.mubr.bf16.mxu0 0
    %370 = vmatmul.mubr.bf16.gmra.mrb[0].mxu0 %v249
    %v371 = vpop.f32.mrb[0].mxu0
    %v372 = vadd.f32 %v271, %v371
    %v373 = vpop.f32.mrb[0].mxu0
    %v374 = vpop.f32.mrb[0].mxu0
    %v375 = vadd.f32 %v271, %v374
    %v376 = vpop.f32.mrb[0].mxu0
    %377 = vdwg.mxu0
    %378 = vst [vmem:[#allocation5] sm:$0xff] %v356
    %379 = vst [vmem:[#allocation5 + $0x8] sm:$0xff] %v359
    %380 = vst [vmem:[#allocation5 + $0x10] sm:$0xff] %v364
    %381 = vst [vmem:[#allocation5 + $0x18] sm:$0xff] %v367
    %382 = vst [vmem:[#allocation5 + $0x20] sm:$0xff] %v372
    %383 = vst [vmem:[#allocation5 + $0x28] sm:$0xff] %v375
    // Predicated region
    $region34: #{tpu_custom_call.1} parent=1 // pred_check
      _
    $region35: #{tpu_custom_call.1} parent=1 // pred_check_branch
      %385 = sbr.rel (0) target = $region37
    $region36: #{tpu_custom_call.1} parent=1 // pred_region
      %s387 = ssub.s32 768, 768
      %388 = vsyncadd [#allocation4], %s387
      %s389 = sshll.u32 [#allocation5], 4
      %s390 = int_to_ptr.vmem [resolvable:$true] %s389
      %395 = dma.vmem_to_hbm [thread:$0]  %s390, 768, %s7, [#allocation4], 128, 128, 8
    $region37: #{tpu_custom_call.1} parent=1 // pred_fallthru
      _
    // Predicated region
    $region38: #{tpu_custom_call.1} parent=1 // pred_check
      _
    $region39: #{tpu_custom_call.1} parent=1 // pred_check_branch
      %397 = sbr.rel (0) target = $region41
    $region40: #{tpu_custom_call.1} parent=1 // pred_region
      %398 = dma.done [#allocation4], 768
    $region41: #{tpu_custom_call.1} parent=1 // pred_fallthru
      _
    %399 = vsyncpa [#allocation3], 1
    %400 = vsyncpa [#allocation4], 1

</llo_original>
